<compile_context>
chip_gen: v7x
topology: tpu7x:2x2x1
jax: 0.10.0
libtpu: 0.0.40
codegen_flags: <defaults>
</compile_context>

<pallas_src>
import functools

import jax
import jax.numpy as jnp
import numpy as np
from jax.experimental import pallas as pl
from jax.experimental.pallas import tpu as pltpu


# ---------------------------------------------------------------------------
# Kernel helpers
# ---------------------------------------------------------------------------
def _build_mask(idx_ref, aniso, k, tk):
    """(TK, tile) f32 mask: xy one-hot counts + aniso * z one-hot counts."""
    src0 = k * tk                                        # first source well
    iota = jax.lax.broadcasted_iota(jnp.int32, (tk, 1), 0) + src0
    idxs = idx_ref[...]                                  # (6, tile) i32
    one = jnp.float32(1.0)
    zero = jnp.float32(0.0)

    def oh(r):
        # (TK,1) == (1,tile) -> (TK,tile) bool -> 1.0/0.0 f32 (no int temps).
        return jnp.where(iota == idxs[r:r + 1, :], one, zero)

    s_xy = (oh(0) + oh(1)) + (oh(2) + oh(3))
    s_z = oh(4) + oh(5)
    return s_xy + aniso * s_z                            # (TK, tile) f32


def _epilogue(y_t, L, par, rate):
    """Elementwise update given the local field L = (xL; yL)."""
    X = y_t[0:1]
    Y = y_t[1:2]
    xL = L[0:1]
    yL = L[1:2]
    hx = par[0:1]
    hy = par[1:2]
    beta = par[2:3]
    edis = par[3:4]
    nsq = X * X + Y * Y
    cross = xL * Y - yL * X
    # out0 = rate*Y*cross + edis*Y - yL + hy + beta*nsq*Y  =  a*Y - yL + hy
    # out1 = -rate*X*cross - edis*X + xL - hx - beta*nsq*X =  xL - hx - a*X
    a = rate * cross + edis + beta * nsq
    return jnp.concatenate([a * Y - yL + hy, xL - hx - a * X], axis=0)


# ---------------------------------------------------------------------------
# Kernels
# ---------------------------------------------------------------------------
def _dgpe_fused_kernel(y_src_ref, y_out_ref, idx_ref, par_ref, sc_ref,
                       out_ref, acc_ref):
    """Modes 0/1: gather (source-tiled) + elementwise update, fused."""
    k = pl.program_id(1)
    nk = pl.num_programs(1)
    tk = y_src_ref.shape[1]

    @pl.when(k == 0)
    def _():
        acc_ref[...] = jnp.zeros_like(acc_ref)

    s = _build_mask(idx_ref, sc_ref[1], k, tk)
    acc_ref[...] += jnp.dot(y_src_ref[...], s,
                            preferred_element_type=jnp.float32)

    @pl.when(k == nk - 1)
    def _():
        L = sc_ref[0] * acc_ref[...]                     # J * (sum of gathers)
        out_ref[...] = _epilogue(y_out_ref[...], L, par_ref[...], sc_ref[2])


def _dgpe_gather_energy_kernel(y_src_ref, y_out_ref, idx_ref, par_ref, sc_ref,
                               L_ref, e_ref, acc_ref):
    """Mode 2 pass A: local field L and per-well energy terms."""
    k = pl.program_id(1)
    nk = pl.num_programs(1)
    tk = y_src_ref.shape[1]

    @pl.when(k == 0)
    def _():
        acc_ref[...] = jnp.zeros_like(acc_ref)

    s = _build_mask(idx_ref, sc_ref[1], k, tk)
    acc_ref[...] += jnp.dot(y_src_ref[...], s,
                            preferred_element_type=jnp.float32)

    @pl.when(k == nk - 1)
    def _():
        L = sc_ref[0] * acc_ref[...]
        L_ref[...] = L
        y_t = y_out_ref[...]
        par = par_ref[...]
        X = y_t[0:1]
        Y = y_t[1:2]
        hx = par[0:1]
        hy = par[1:2]
        beta = par[2:3]
        edis = par[3:4]
        nsq = X * X + Y * Y
        # Padded wells have X = Y = hx = hy = beta = edis = 0 -> contribute 0.
        e_ref[...] = (beta * 0.5 * nsq * nsq + edis * nsq
                      - (X * L[0:1] + Y * L[1:2]) + hx * X + hy * Y)


def _dgpe_update_kernel(y_ref, L_ref, par_ref, sc_ref, out_ref):
    """Mode 2 pass B: elementwise update with the precomputed L and rate."""
    out_ref[...] = _epilogue(y_ref[...], L_ref[...], par_ref[...], sc_ref[2])


# ---------------------------------------------------------------------------
# Wrapper / builder
# ---------------------------------------------------------------------------
def make_dgpe_forward(N_wells, J, anisotropy, gamma,
                      nn_idx_1, nn_idx_2, nn_idy_1, nn_idy_2,
                      nn_idz_1, nn_idz_2,
                      h_dis_x_flat, h_dis_y_flat, beta_flat, e_disorder_flat,
                      E_desired, gamma_reduction, lam1, lam2,
                      smooth_quench, temperature_dependent_rate):
    # Host-side branch selection (mirrors the .item() checks in torch).
    if int(temperature_dependent_rate) == 0:
        mode = 0
    elif int(smooth_quench) > 0:
        mode = 1
    else:
        mode = 2

    n_pad = -(-N_wells // 128) * 128
    pad = n_pad - N_wells
    m = n_pad // 128

    # Output-well tile: prefer >=2 grid steps on the parallel axis (v7x
    # megacore) while keeping the tile <= 512 lanes.
    if m == 1:
        tile = 128
    else:
        divs = [d for d in range(1, m) if m % d == 0 and d * 128 <= 512]
        tile = 128 * (max(divs) if divs else 1)
    steps_i = n_pad // tile

    # Source-axis block: largest multiple of 128 dividing n_pad, <= 512.
    # Bounds the (TK, tile) mask working set independent of N_wells.
    tk = 128 * max(d for d in range(1, m + 1) if m % d == 0 and d * 128 <= 512)
    steps_k = n_pad // tk

    # Stacked int32 neighbor indices, zero-padded (pad wells gather well 0;
    # their outputs are sliced off / multiplied by zero state).
    idx_np = np.stack([np.asarray(a, np.int32) for a in
                       (nn_idx_1, nn_idx_2, nn_idy_1, nn_idy_2,
                        nn_idz_1, nn_idz_2)])
    idx = jnp.asarray(np.pad(idx_np, ((0, 0), (0, pad))))          # (6, n_pad)

    def _padded(v):
        return np.pad(np.asarray(v, np.float32), (0, pad))

    # Per-well disorder slab only; uniform J/aniso/gamma go through SMEM.
    par = jnp.asarray(np.stack([
        _padded(h_dis_x_flat),
        _padded(h_dis_y_flat),
        _padded(beta_flat),
        _padded(e_disorder_flat),
    ]))                                                            # (4, n_pad)

    # VMEM budget: the mask build dominates (a few (TK, tile) f32 temps).
    # Never request the full v7x VMEM (64 MiB) -- cap at 48 MiB.
    mask_bytes = 4 * tk * tile
    vmem_limit = int(min(48 * 2 ** 20, max(32 * 2 ** 20, 10 * mask_bytes)))

    # Advisory cost: y source blocks are re-fetched once per output tile; the
    # resident per-tile inputs/outputs are fetched exactly once.
    gather_bytes = 4 * (2 * n_pad * steps_i + (2 + 6 + 4 + 2) * n_pad) + 12
    gather_flops = 12 * n_pad * n_pad        # one M=2 dot + mask compares/adds

    smem_spec = pl.BlockSpec(memory_space=pltpu.MemorySpace.SMEM)
    gather_in_specs = [
        pl.BlockSpec((2, tk), lambda i, k: (0, k)),      # y, source block
        pl.BlockSpec((2, tile), lambda i, k: (0, i)),    # y, output tile
        pl.BlockSpec((6, tile), lambda i, k: (0, i)),    # neighbor indices
        pl.BlockSpec((4, tile), lambda i, k: (0, i)),    # hx/hy/beta/edis
        smem_spec,                                       # [J, aniso, rate]
    ]
    gather_params = pltpu.CompilerParams(
        dimension_semantics=("parallel", "arbitrary"),
        vmem_limit_bytes=vmem_limit)

    fused_call = gather_call = update_call = None
    if mode != 2:
        fused_call = pl.pallas_call(
            _dgpe_fused_kernel,
            out_shape=jax.ShapeDtypeStruct((2, n_pad), jnp.float32),
            grid=(steps_i, steps_k),
            in_specs=gather_in_specs,
            out_specs=pl.BlockSpec((2, tile), lambda i, k: (0, i)),
            scratch_shapes=[pltpu.VMEM((2, tile), jnp.float32)],
            compiler_params=gather_params,
            cost_estimate=pl.CostEstimate(
                flops=int(gather_flops), transcendentals=0,
                bytes_accessed=int(gather_bytes)),
        )
    else:
        gather_call = pl.pallas_call(
            _dgpe_gather_energy_kernel,
            out_shape=(jax.ShapeDtypeStruct((2, n_pad), jnp.float32),
                       jax.ShapeDtypeStruct((1, n_pad), jnp.float32)),
            grid=(steps_i, steps_k),
            in_specs=gather_in_specs,
            out_specs=(pl.BlockSpec((2, tile), lambda i, k: (0, i)),
                       pl.BlockSpec((1, tile), lambda i, k: (0, i))),
            scratch_shapes=[pltpu.VMEM((2, tile), jnp.float32)],
            compiler_params=gather_params,
            cost_estimate=pl.CostEstimate(
                flops=int(gather_flops), transcendentals=0,
                bytes_accessed=int(gather_bytes + 4 * n_pad)),
        )
        update_call = pl.pallas_call(
            _dgpe_update_kernel,
            out_shape=jax.ShapeDtypeStruct((2, n_pad), jnp.float32),
            grid=(steps_i,),
            in_specs=[pl.BlockSpec((2, tile), lambda i: (0, i)),   # y
                      pl.BlockSpec((2, tile), lambda i: (0, i)),   # L
                      pl.BlockSpec((4, tile), lambda i: (0, i)),   # disorder
                      smem_spec],                                  # scalars
            out_specs=pl.BlockSpec((2, tile), lambda i: (0, i)),
            compiler_params=pltpu.CompilerParams(
                dimension_semantics=("parallel",),
                vmem_limit_bytes=32 * 2 ** 20),
            cost_estimate=pl.CostEstimate(
                flops=int(20 * n_pad), transcendentals=0,
                bytes_accessed=int(4 * 10 * n_pad)),
        )

    J_c = jnp.float32(J)
    an_c = jnp.float32(anisotropy)
    ga_f = float(gamma)
    lam1_f = float(lam1)
    lam2_f = float(lam2)
    e_des_f = float(E_desired)
    g_red_f = float(gamma_reduction)

    def forward(t, y):
        y2 = jnp.asarray(y, jnp.float32).reshape(2, N_wells)
        if pad:
            y2 = jnp.pad(y2, ((0, 0), (0, pad)))

        if mode == 0:
            rate = jnp.float32(ga_f)
            sc = jnp.stack([J_c, an_c, rate])
            out = fused_call(y2, y2, idx, par, sc)
        elif mode == 1:
            # Quench transcendentals hoisted out of the kernel.
            t32 = jnp.asarray(t, jnp.float32)
            q = -(1.0 / (lam1_f - lam2_f)) * (
                lam1_f * jnp.exp(-lam1_f * t32)
                - lam2_f * jnp.exp(-lam2_f * t32))
            rate = (q * ga_f) * ga_f          # quenching_profile(t) * gamma
            sc = jnp.stack([J_c, an_c, rate.astype(jnp.float32)])
            out = fused_call(y2, y2, idx, par, sc)
        else:
            # Two-pass energy-feedback path: (A) L + per-well energy terms,
            # (scalar reduction + rate in JAX), (B) elementwise update.
            sc_a = jnp.stack([J_c, an_c, jnp.float32(0.0)])
            L, e_w = gather_call(y2, y2, idx, par, sc_a)
            energy = jnp.sum(e_w)                        # pad wells add 0
            rate = (jnp.float32(g_red_f) * (energy - jnp.float32(e_des_f))
                    * jnp.float32(ga_f))
            sc_b = jnp.stack([J_c, an_c, rate])
            out = update_call(y2, L, par, sc_b)

        return out[:, :N_wells].reshape(2 * N_wells)

    return jax.jit(forward)


# ---------------------------------------------------------------------------
# Pure-numpy float32 reference mirroring the torch forward exactly.
# ---------------------------------------------------------------------------
def _reference_forward(t, y, N, Jv, aniso, gammav, idx6, hx, hy, beta, edis,
                       E_des, g_red, lam1, lam2, mode):
    y = np.asarray(y, np.float32)
    X = y[:N]
    Y = y[N:]
    gX = [X[idx6[k]] for k in range(6)]
    gY = [Y[idx6[k]] for k in range(6)]
    xL = Jv * (gX[0] + gX[1] + gX[2] + gX[3] + aniso * (gX[4] + gX[5]))
    yL = Jv * (gY[0] + gY[1] + gY[2] + gY[3] + aniso * (gY[4] + gY[5]))
    nsq = Y * Y + X * X
    cross = xL * Y - yL * X
    if mode == 0:
        rate = gammav
    elif mode == 1:
        quench = -gammav * (1.0 / (lam1 - lam2)) * (
            lam1 * np.exp(-lam1 * t) - lam2 * np.exp(-lam2 * t))
        rate = quench * gammav
    else:
        energy = np.sum(beta * 0.5 * (X * X + Y * Y) ** 2
                        + edis * (X * X + Y * Y)
                        - (X * xL + Y * yL) + hx * X + hy * Y)
        rate = (g_red * (energy - E_des)) * gammav
    out0 = (rate * Y) * cross + edis * Y - yL + hy + beta * nsq * Y
    out1 = -(rate * X) * cross - edis * X + xL - hx - beta * nsq * X
    return np.concatenate([out0, out1], axis=0)


if __name__ == "__main__":
    J = 1.0
    anisotropy = 0.5
    gamma = 0.01
    E_desired = -10.0
    gamma_reduction = 0.1
    lam1 = 0.3
    lam2 = 0.7
    t = 0.25

    flag_combos = [
        (0, 0, 0),   # temperature_dependent_rate=0              -> mode 0
        (1, 1, 1),   # tdr=1, smooth_quench=1                    -> mode 1
        (2, 1, 0),   # tdr=1, smooth_quench=0 (energy feedback)  -> mode 2
    ]

    # 128 (single block), 200 (padding + 2 output tiles), 640 (multi-tile
    # output axis AND multi-block source reduction axis).
    for case_i, N_wells in enumerate((128, 200, 640)):
        key = jax.random.fold_in(jax.random.PRNGKey(0), case_i)
        keys = jax.random.split(key, 12)

        y = jax.random.normal(keys[0], (2 * N_wells,), dtype=jnp.float32)
        nn = [np.asarray(jax.random.randint(keys[1 + k], (N_wells,),
                                            0, N_wells), np.int32)
              for k in range(6)]
        h_dis_x = 0.05 * jax.random.normal(keys[7], (N_wells,),
                                           dtype=jnp.float32)
        h_dis_y = 0.05 * jax.random.normal(keys[8], (N_wells,),
                                           dtype=jnp.float32)
        beta_flat = 0.1 + 0.01 * jax.random.normal(keys[9], (N_wells,),
                                                   dtype=jnp.float32)
        e_disorder = 0.2 * jax.random.normal(keys[10], (N_wells,),
                                             dtype=jnp.float32)

        # numpy copies for the reference
        Jv = np.full((N_wells,), J, np.float32)
        anv = np.full((N_wells,), anisotropy, np.float32)
        gav = np.full((N_wells,), gamma, np.float32)
        hx_np = np.asarray(h_dis_x, np.float32)
        hy_np = np.asarray(h_dis_y, np.float32)
        beta_np = np.asarray(beta_flat, np.float32)
        edis_np = np.asarray(e_disorder, np.float32)

        for mode, tdr, sq in flag_combos:
            fwd = make_dgpe_forward(
                N_wells, J, anisotropy, gamma,
                nn[0], nn[1], nn[2], nn[3], nn[4], nn[5],
                h_dis_x, h_dis_y, beta_flat, e_disorder,
                E_desired, gamma_reduction, lam1, lam2,
                smooth_quench=sq, temperature_dependent_rate=tdr)

            out = jax.block_until_ready(fwd(t, y))
            ref = _reference_forward(
                np.float32(t), np.asarray(y), N_wells, Jv, anv, gav, nn,
                hx_np, hy_np, beta_np, edis_np,
                np.float32(E_desired), np.float32(gamma_reduction),
                np.float32(lam1), np.float32(lam2), mode)

            assert out.shape == (2 * N_wells,)
            np.testing.assert_allclose(np.asarray(out), ref,
                                       rtol=1e-3, atol=1e-3)

    print("KERNEL_OK")
</pallas_src>

<mosaic_0001>
module attributes {stable_mosaic.version = 11 : i64} {
  func.func @_dgpe_fused_kernel(%arg0: i32, %arg1: i32, %arg2: memref<2x128xf32, #tpu.memory_space<vmem>>, %arg3: memref<2x128xf32, #tpu.memory_space<vmem>>, %arg4: memref<6x128xi32, #tpu.memory_space<vmem>>, %arg5: memref<4x128xf32, #tpu.memory_space<vmem>>, %arg6: memref<3xf32, #tpu.memory_space<smem>>, %arg7: memref<2x128xf32, #tpu.memory_space<vmem>>, %arg8: memref<2x128xf32, #tpu.memory_space<vmem>>) attributes {dimension_semantics = [#tpu.dimension_semantics<parallel>, #tpu.dimension_semantics<arbitrary>], iteration_bounds = array<i64: 1, 1>, scalar_prefetch = 0 : i64, scratch_operands = 1 : i64, tpu.core_type = #tpu.core_type<tc>, window_params = [{transform_indices = @transform_0, window_bounds = array<i64: 2, 128>}, {transform_indices = @transform_1, window_bounds = array<i64: 2, 128>}, {transform_indices = @transform_2, window_bounds = array<i64: 6, 128>}, {transform_indices = @transform_3, window_bounds = array<i64: 4, 128>}, {transform_indices = @transform_4, window_bounds = array<i64: 3>}, {transform_indices = @transform_5, window_bounds = array<i64: 2, 128>}]} {
    %c0_i32 = arith.constant 0 : i32
    %0 = arith.cmpi eq, %arg1, %c0_i32 : i32
    %1 = arith.extui %0 : i1 to i32
    %c0_i32_0 = arith.constant 0 : i32
    %2 = arith.cmpi ne, %1, %c0_i32_0 : i32
    scf.if %2 {
      %cst_22 = arith.constant 0.000000e+00 : f32
      %66 = vector.broadcast %cst_22 : f32 to vector<2x128xf32>
      %c0_23 = arith.constant 0 : index
      %c0_24 = arith.constant 0 : index
      %67 = vector.load %arg8[%c0_23, %c0_24] : memref<2x128xf32, #tpu.memory_space<vmem>>, vector<2x128xf32>
      tpu.vector_store %arg8[%c0_23, %c0_24], %66 {strides = array<i32>} : memref<2x128xf32, #tpu.memory_space<vmem>>, vector<2x128xf32>,
    } else {
    }
    %c1 = arith.constant 1 : index
    %3 = memref.load %arg6[%c1] : memref<3xf32, #tpu.memory_space<smem>>
    %c128_i32 = arith.constant 128 : i32
    %4 = arith.muli %arg1, %c128_i32 : i32
    %5 = tpu.iota {dimensions = array<i32: 0>} : vector<128x1xi32>
    %6 = vector.broadcast %4 : i32 to vector<128x1xi32>
    %7 = arith.addi %5, %6 : vector<128x1xi32>
    %c0 = arith.constant 0 : index
    %c0_1 = arith.constant 0 : index
    %8 = vector.load %arg4[%c0, %c0_1] : memref<6x128xi32, #tpu.memory_space<vmem>>, vector<6x128xi32>
    %9 = vector.extract_strided_slice %8 {offsets = [0, 0], sizes = [1, 128], strides = [1, 1]} : vector<6x128xi32> to vector<1x128xi32>
    %10 = vector.broadcast %7 : vector<128x1xi32> to vector<128x128xi32>
    %11 = vector.broadcast %9 : vector<1x128xi32> to vector<128x128xi32>
    %12 = arith.cmpi eq, %10, %11 : vector<128x128xi32>
    %cst = arith.constant 1.000000e+00 : f32
    %cst_2 = arith.constant 0.000000e+00 : f32
    %13 = vector.broadcast %cst : f32 to vector<128x128xf32>
    %14 = vector.broadcast %cst_2 : f32 to vector<128x128xf32>
    %15 = arith.select %12, %13, %14 : vector<128x128xi1>, vector<128x128xf32>
    %16 = vector.extract_strided_slice %8 {offsets = [1, 0], sizes = [1, 128], strides = [1, 1]} : vector<6x128xi32> to vector<1x128xi32>
    %17 = vector.broadcast %7 : vector<128x1xi32> to vector<128x128xi32>
    %18 = vector.broadcast %16 : vector<1x128xi32> to vector<128x128xi32>
    %19 = arith.cmpi eq, %17, %18 : vector<128x128xi32>
    %cst_3 = arith.constant 1.000000e+00 : f32
    %cst_4 = arith.constant 0.000000e+00 : f32
    %20 = vector.broadcast %cst_3 : f32 to vector<128x128xf32>
    %21 = vector.broadcast %cst_4 : f32 to vector<128x128xf32>
    %22 = arith.select %19, %20, %21 : vector<128x128xi1>, vector<128x128xf32>
    %23 = arith.addf %15, %22 : vector<128x128xf32>
    %24 = vector.extract_strided_slice %8 {offsets = [2, 0], sizes = [1, 128], strides = [1, 1]} : vector<6x128xi32> to vector<1x128xi32>
    %25 = vector.broadcast %7 : vector<128x1xi32> to vector<128x128xi32>
    %26 = vector.broadcast %24 : vector<1x128xi32> to vector<128x128xi32>
    %27 = arith.cmpi eq, %25, %26 : vector<128x128xi32>
    %cst_5 = arith.constant 1.000000e+00 : f32
    %cst_6 = arith.constant 0.000000e+00 : f32
    %28 = vector.broadcast %cst_5 : f32 to vector<128x128xf32>
    %29 = vector.broadcast %cst_6 : f32 to vector<128x128xf32>
    %30 = arith.select %27, %28, %29 : vector<128x128xi1>, vector<128x128xf32>
    %31 = vector.extract_strided_slice %8 {offsets = [3, 0], sizes = [1, 128], strides = [1, 1]} : vector<6x128xi32> to vector<1x128xi32>
    %32 = vector.broadcast %7 : vector<128x1xi32> to vector<128x128xi32>
    %33 = vector.broadcast %31 : vector<1x128xi32> to vector<128x128xi32>
    %34 = arith.cmpi eq, %32, %33 : vector<128x128xi32>
    %cst_7 = arith.constant 1.000000e+00 : f32
    %cst_8 = arith.constant 0.000000e+00 : f32
    %35 = vector.broadcast %cst_7 : f32 to vector<128x128xf32>
    %36 = vector.broadcast %cst_8 : f32 to vector<128x128xf32>
    %37 = arith.select %34, %35, %36 : vector<128x128xi1>, vector<128x128xf32>
    %38 = arith.addf %30, %37 : vector<128x128xf32>
    %39 = arith.addf %23, %38 : vector<128x128xf32>
    %40 = vector.extract_strided_slice %8 {offsets = [4, 0], sizes = [1, 128], strides = [1, 1]} : vector<6x128xi32> to vector<1x128xi32>
    %41 = vector.broadcast %7 : vector<128x1xi32> to vector<128x128xi32>
    %42 = vector.broadcast %40 : vector<1x128xi32> to vector<128x128xi32>
    %43 = arith.cmpi eq, %41, %42 : vector<128x128xi32>
    %cst_9 = arith.constant 1.000000e+00 : f32
    %cst_10 = arith.constant 0.000000e+00 : f32
    %44 = vector.broadcast %cst_9 : f32 to vector<128x128xf32>
    %45 = vector.broadcast %cst_10 : f32 to vector<128x128xf32>
    %46 = arith.select %43, %44, %45 : vector<128x128xi1>, vector<128x128xf32>
    %47 = vector.extract_strided_slice %8 {offsets = [5, 0], sizes = [1, 128], strides = [1, 1]} : vector<6x128xi32> to vector<1x128xi32>
    %48 = vector.broadcast %7 : vector<128x1xi32> to vector<128x128xi32>
    %49 = vector.broadcast %47 : vector<1x128xi32> to vector<128x128xi32>
    %50 = arith.cmpi eq, %48, %49 : vector<128x128xi32>
    %cst_11 = arith.constant 1.000000e+00 : f32
    %cst_12 = arith.constant 0.000000e+00 : f32
    %51 = vector.broadcast %cst_11 : f32 to vector<128x128xf32>
    %52 = vector.broadcast %cst_12 : f32 to vector<128x128xf32>
    %53 = arith.select %50, %51, %52 : vector<128x128xi1>, vector<128x128xf32>
    %54 = arith.addf %46, %53 : vector<128x128xf32>
    %55 = vector.broadcast %3 : f32 to vector<128x128xf32>
    %56 = arith.mulf %55, %54 : vector<128x128xf32>
    %57 = arith.addf %39, %56 : vector<128x128xf32>
    %c0_13 = arith.constant 0 : index
    %c0_14 = arith.constant 0 : index
    %58 = vector.load %arg8[%c0_13, %c0_14] : memref<2x128xf32, #tpu.memory_space<vmem>>, vector<2x128xf32>
    %c0_15 = arith.constant 0 : index
    %c0_16 = arith.constant 0 : index
    %59 = vector.load %arg2[%c0_15, %c0_16] : memref<2x128xf32, #tpu.memory_space<vmem>>, vector<2x128xf32>
    %cst_17 = arith.constant dense<0.000000e+00> : vector<2x128xf32>
    %60 = tpu.matmul %59, %57, %cst_17 {dimension_numbers = #tpu.dot_dimension_numbers<[1], [0], [0], [1], [0, 0, 1, 1], [], []>} : vector<2x128xf32>, vector<128x128xf32>, vector<2x128xf32> -> vector<2x128xf32>
    %61 = arith.addf %58, %60 : vector<2x128xf32>
    %c0_18 = arith.constant 0 : index
    %c0_19 = arith.constant 0 : index
    %62 = vector.load %arg8[%c0_18, %c0_19] : memref<2x128xf32, #tpu.memory_space<vmem>>, vector<2x128xf32>
    tpu.vector_store %arg8[%c0_18, %c0_19], %61 {strides = array<i32>} : memref<2x128xf32, #tpu.memory_space<vmem>>, vector<2x128xf32>,
    %c0_i32_20 = arith.constant 0 : i32
    %63 = arith.cmpi eq, %arg1, %c0_i32_20 : i32
    %64 = arith.extui %63 : i1 to i32
    %c0_i32_21 = arith.constant 0 : i32
    %65 = arith.cmpi ne, %64, %c0_i32_21 : i32
    scf.if %65 {
      %c0_22 = arith.constant 0 : index
      %66 = memref.load %arg6[%c0_22] : memref<3xf32, #tpu.memory_space<smem>>
      %c0_23 = arith.constant 0 : index
      %c0_24 = arith.constant 0 : index
      %67 = vector.load %arg8[%c0_23, %c0_24] : memref<2x128xf32, #tpu.memory_space<vmem>>, vector<2x128xf32>
      %68 = vector.broadcast %66 : f32 to vector<2x128xf32>
      %69 = arith.mulf %68, %67 : vector<2x128xf32>
      %c0_25 = arith.constant 0 : index
      %c0_26 = arith.constant 0 : index
      %70 = vector.load %arg3[%c0_25, %c0_26] : memref<2x128xf32, #tpu.memory_space<vmem>>, vector<2x128xf32>
      %c0_27 = arith.constant 0 : index
      %c0_28 = arith.constant 0 : index
      %71 = vector.load %arg5[%c0_27, %c0_28] : memref<4x128xf32, #tpu.memory_space<vmem>>, vector<4x128xf32>
      %c2 = arith.constant 2 : index
      %72 = memref.load %arg6[%c2] : memref<3xf32, #tpu.memory_space<smem>>
      %73 = vector.extract_strided_slice %70 {offsets = [0, 0], sizes = [1, 128], strides = [1, 1]} : vector<2x128xf32> to vector<1x128xf32>
      %74 = vector.extract_strided_slice %70 {offsets = [1, 0], sizes = [1, 128], strides = [1, 1]} : vector<2x128xf32> to vector<1x128xf32>
      %75 = vector.extract_strided_slice %69 {offsets = [0, 0], sizes = [1, 128], strides = [1, 1]} : vector<2x128xf32> to vector<1x128xf32>
      %76 = vector.extract_strided_slice %69 {offsets = [1, 0], sizes = [1, 128], strides = [1, 1]} : vector<2x128xf32> to vector<1x128xf32>
      %77 = vector.extract_strided_slice %71 {offsets = [0, 0], sizes = [1, 128], strides = [1, 1]} : vector<4x128xf32> to vector<1x128xf32>
      %78 = vector.extract_strided_slice %71 {offsets = [1, 0], sizes = [1, 128], strides = [1, 1]} : vector<4x128xf32> to vector<1x128xf32>
      %79 = vector.extract_strided_slice %71 {offsets = [2, 0], sizes = [1, 128], strides = [1, 1]} : vector<4x128xf32> to vector<1x128xf32>
      %80 = vector.extract_strided_slice %71 {offsets = [3, 0], sizes = [1, 128], strides = [1, 1]} : vector<4x128xf32> to vector<1x128xf32>
      %81 = arith.mulf %73, %73 : vector<1x128xf32>
      %82 = arith.mulf %74, %74 : vector<1x128xf32>
      %83 = arith.addf %81, %82 : vector<1x128xf32>
      %84 = arith.mulf %75, %74 : vector<1x128xf32>
      %85 = arith.mulf %76, %73 : vector<1x128xf32>
      %86 = arith.subf %84, %85 : vector<1x128xf32>
      %87 = vector.broadcast %72 : f32 to vector<1x128xf32>
      %88 = arith.mulf %87, %86 : vector<1x128xf32>
      %89 = arith.addf %88, %80 : vector<1x128xf32>
      %90 = arith.mulf %79, %83 : vector<1x128xf32>
      %91 = arith.addf %89, %90 : vector<1x128xf32>
      %92 = arith.mulf %91, %74 : vector<1x128xf32>
      %93 = arith.subf %92, %76 : vector<1x128xf32>
      %94 = arith.addf %93, %78 : vector<1x128xf32>
      %95 = arith.subf %75, %77 : vector<1x128xf32>
      %96 = arith.mulf %91, %73 : vector<1x128xf32>
      %97 = arith.subf %95, %96 : vector<1x128xf32>
      %98 = tpu.concatenate %94, %97 in 0 : vector<1x128xf32>, vector<1x128xf32> -> vector<2x128xf32>
      %c0_29 = arith.constant 0 : index
      %c0_30 = arith.constant 0 : index
      %99 = vector.load %arg7[%c0_29, %c0_30] : memref<2x128xf32, #tpu.memory_space<vmem>>, vector<2x128xf32>
      tpu.vector_store %arg7[%c0_29, %c0_30], %98 {strides = array<i32>} : memref<2x128xf32, #tpu.memory_space<vmem>>, vector<2x128xf32>,
    } else {
    }
    return
  }
  func.func @transform_0(%arg0: i32, %arg1: i32) -> (i32, i32) {
    %c0_i32 = arith.constant 0 : i32
    %c0_i32_0 = arith.constant 0 : i32
    return %c0_i32, %arg1 : i32, i32
  }
  func.func @transform_1(%arg0: i32, %arg1: i32) -> (i32, i32) {
    %c0_i32 = arith.constant 0 : i32
    %c0_i32_0 = arith.constant 0 : i32
    return %c0_i32, %arg0 : i32, i32
  }
  func.func @transform_2(%arg0: i32, %arg1: i32) -> (i32, i32) {
    %c0_i32 = arith.constant 0 : i32
    %c0_i32_0 = arith.constant 0 : i32
    return %c0_i32, %arg0 : i32, i32
  }
  func.func @transform_3(%arg0: i32, %arg1: i32) -> (i32, i32) {
    %c0_i32 = arith.constant 0 : i32
    %c0_i32_0 = arith.constant 0 : i32
    return %c0_i32, %arg0 : i32, i32
  }
  func.func @transform_4(%arg0: i32, %arg1: i32) -> i32 {
    %c0_i32 = arith.constant 0 : i32
    %c0_i32_0 = arith.constant 0 : i32
    return %c0_i32 : i32
  }
  func.func @transform_5(%arg0: i32, %arg1: i32) -> (i32, i32) {
    %c0_i32 = arith.constant 0 : i32
    %c0_i32_0 = arith.constant 0 : i32
    return %c0_i32, %arg0 : i32, i32
  }
}

</mosaic_0001>

<llo_original>
// kernel: forward.1
$region0: #{forward.1}
  #allocation0 [shape = 'u32[]', space=smem, size = 0x4, offset = 0x4, fixed_abs, tag = 'smem constant byte address 0x4 - core index']
  #allocation1 [shape = 'u32[144,128]{1,0:T(1,128)}', space=vmem, size = 0x12000, scoped, tag = 'internal scratch']
  #allocation2 [shape = 'f32[2,128]{1,0:T(2,128)}', space=vmem, size = 0x400, scoped, tag = 'scratch operand']
  %s0 = inlined_call_operand.vmem [shape: f32[2,128], index: 0, kind: input, shape index: {}, may-alias: {0,1}]
  %s1 = inlined_call_operand.vmem [shape: f32[2,128], index: 1, kind: input, shape index: {}, may-alias: {0,1}]
  %s2 = inlined_call_operand.vmem [shape: s32[6,128], index: 2, kind: input, shape index: {}]
  %s3 = inlined_call_operand.vmem [shape: f32[4,128], index: 3, kind: input, shape index: {}]
  %s4 = inlined_call_operand.vmem [shape: f32[3], index: 4, kind: input, shape index: {}]
  %s5 = inlined_call_operand.hbm [shape: f32[2,128], index: 5, kind: output, shape index: {}]
  %s6 = sld [smem:[#allocation0]]
  $region42: #{forward.1} parent=0
    _
  %s8 = ssub.s32 1, %s6
  %s9 = scalar_select 0, %s8, %s6
  $region1: #{forward.1} parent=0
    #allocation3 [shape = 'u8[512]{0}', space=smem, size = 0x200, scoped, tag = 'input window, operand 4, single buffered']
    #allocation4 [shape = 's32[1]{0}', space=sflag, size = 0x4, scoped, tag = 'scoped memory for forward.1']
    #allocation5 [shape = 's32[1]{0}', space=sflag, size = 0x4, scoped, tag = 'scoped memory for forward.1']
    #allocation6 [shape = 'u8[1024]{0}', space=vmem, size = 0x400, scoped, tag = 'output window, operand 0, single buffered']
    %10 = vsyncpa [#allocation5], 0
    %11 = vsyncpa [#allocation4], 0
    // Predicated region
    $region2: #{forward.1} parent=1 // pred_check
      _
    $region3: #{forward.1} parent=1 // pred_check_branch
      %13 = sbr.rel (0) target = $region5
    $region4: #{forward.1} parent=1 // pred_region
      _
    $region5: #{forward.1} parent=1 // pred_fallthru
      _
    // Predicated region
    $region6: #{forward.1} parent=1 // pred_check
      _
    $region7: #{forward.1} parent=1 // pred_check_branch
      %15 = sbr.rel (0) target = $region9
    $region8: #{forward.1} parent=1 // pred_region
      _
    $region9: #{forward.1} parent=1 // pred_fallthru
      _
    // Predicated region
    $region10: #{forward.1} parent=1 // pred_check
      _
    $region11: #{forward.1} parent=1 // pred_check_branch
      %17 = sbr.rel (0) target = $region13
    $region12: #{forward.1} parent=1 // pred_region
      _
    $region13: #{forward.1} parent=1 // pred_fallthru
      _
    // Predicated region
    $region14: #{forward.1} parent=1 // pred_check
      _
    $region15: #{forward.1} parent=1 // pred_check_branch
      %19 = sbr.rel (0) target = $region17
    $region16: #{forward.1} parent=1 // pred_region
      _
    $region17: #{forward.1} parent=1 // pred_fallthru
      _
    // Predicated region
    $region18: #{forward.1} parent=1 // pred_check
      _
    $region19: #{forward.1} parent=1 // pred_check_branch
      %21 = sbr.rel (0) target = $region21
    $region20: #{forward.1} parent=1 // pred_region
      %s23 = ssub.s32 16, 16
      %24 = vsyncadd [#allocation5], %s23
      %s26 = sshll.u32 %s4, 4
      %s27 = int_to_ptr.vmem [resolvable:$true] %s26
      %29 = dma.vmem_to_smem %s27, 16, [#allocation3], [#allocation5]
    $region21: #{forward.1} parent=1 // pred_fallthru
      _
    // Predicated region
    $region22: #{forward.1} parent=1 // pred_check
      _
    $region23: #{forward.1} parent=1 // pred_check_branch
      %31 = sbr.rel (0) target = $region25
    $region24: #{forward.1} parent=1 // pred_region
      %32 = dma.done [#allocation5], 16
    $region25: #{forward.1} parent=1 // pred_fallthru
      _
    %33 = sfence
    %p34 = scmp.eq.s32.totalorder 0, 0
    // Predicated region
    $region26: #{forward.1} parent=1 // pred_check
      %p35 = pneg %p34
    $region27: #{forward.1} parent=1 // pred_check_branch
      %37 = sbr.rel (%p35) target = $region29
    $region28: #{forward.1} parent=1 // pred_region
      %38 = vst [vmem:[#allocation2] sm:$0x3] 0.0
    $region29: #{forward.1} parent=1 // pred_fallthru
      _
    %s39 = sld [smem:[#allocation3 + $0x1]]
    %s40 = smul.u32 0, 128
    %v41 = vlaneseq
    %v42 = vshrl.u32 %v41, 7
    %v43 = vadd.s32 %v42, 8
    %v44 = vadd.s32 %v42, 16
    %v45 = vadd.s32 %v42, 24
    %v46 = vadd.s32 %v42, 32
    %v47 = vadd.s32 %v42, 40
    %v48 = vadd.s32 %v42, 48
    %v49 = vadd.s32 %v42, 56
    %v50 = vadd.s32 %v42, 64
    %v51 = vadd.s32 %v42, 72
    %v52 = vadd.s32 %v42, 80
    %v53 = vadd.s32 %v42, 88
    %v54 = vadd.s32 %v42, 96
    %v55 = vadd.s32 %v42, 104
    %v56 = vadd.s32 %v42, 112
    %v57 = vadd.s32 %v42, 120
    %v58 = vstv %s40
    %v59 = vadd.s32 %v42, %v58
    %v60 = vadd.s32 %v43, %v58
    %v61 = vadd.s32 %v44, %v58
    %v62 = vadd.s32 %v45, %v58
    %v63 = vadd.s32 %v46, %v58
    %v64 = vadd.s32 %v47, %v58
    %v65 = vadd.s32 %v48, %v58
    %v66 = vadd.s32 %v49, %v58
    %v67 = vadd.s32 %v50, %v58
    %v68 = vadd.s32 %v51, %v58
    %v69 = vadd.s32 %v52, %v58
    %v70 = vadd.s32 %v53, %v58
    %v71 = vadd.s32 %v54, %v58
    %v72 = vadd.s32 %v55, %v58
    %v73 = vadd.s32 %v56, %v58
    %v74 = vadd.s32 %v57, %v58
    %v75 = vld [vmem:[%s2] sm:$0x3f]
    %v76 = vlaneseq
    %v77 = vshrl.u32 %v76, 7
    %v78 = vsub.s32 0, %v77
    %v79 = vrot.slane %v75, %v78
    %vm80 = vcmp.eq.s32.totalorder %v59, %v79
    %vm81 = vcmp.eq.s32.totalorder %v60, %v79
    %vm82 = vcmp.eq.s32.totalorder %v61, %v79
    %vm83 = vcmp.eq.s32.totalorder %v62, %v79
    %vm84 = vcmp.eq.s32.totalorder %v63, %v79
    %vm85 = vcmp.eq.s32.totalorder %v64, %v79
    %vm86 = vcmp.eq.s32.totalorder %v65, %v79
    %vm87 = vcmp.eq.s32.totalorder %v66, %v79
    %vm88 = vcmp.eq.s32.totalorder %v67, %v79
    %vm89 = vcmp.eq.s32.totalorder %v68, %v79
    %vm90 = vcmp.eq.s32.totalorder %v69, %v79
    %vm91 = vcmp.eq.s32.totalorder %v70, %v79
    %vm92 = vcmp.eq.s32.totalorder %v71, %v79
    %vm93 = vcmp.eq.s32.totalorder %v72, %v79
    %vm94 = vcmp.eq.s32.totalorder %v73, %v79
    %vm95 = vcmp.eq.s32.totalorder %v74, %v79
    %v96 = vsel %vm80, 1.0, 0.0
    %v97 = vsel %vm81, 1.0, 0.0
    %v98 = vsel %vm82, 1.0, 0.0
    %v99 = vsel %vm83, 1.0, 0.0
    %v100 = vsel %vm84, 1.0, 0.0
    %v101 = vsel %vm85, 1.0, 0.0
    %v102 = vsel %vm86, 1.0, 0.0
    %v103 = vsel %vm87, 1.0, 0.0
    %v104 = vsel %vm88, 1.0, 0.0
    %v105 = vsel %vm89, 1.0, 0.0
    %v106 = vsel %vm90, 1.0, 0.0
    %v107 = vsel %vm91, 1.0, 0.0
    %v108 = vsel %vm92, 1.0, 0.0
    %v109 = vsel %vm93, 1.0, 0.0
    %v110 = vsel %vm94, 1.0, 0.0
    %v111 = vsel %vm95, 1.0, 0.0
    %v112 = vlaneseq
    %v113 = vshrl.u32 %v112, 7
    %v114 = vsub.s32 1, %v113
    %v115 = vrot.slane %v75, %v114
    %vm116 = vcmp.eq.s32.totalorder %v59, %v115
    %vm117 = vcmp.eq.s32.totalorder %v60, %v115
    %vm118 = vcmp.eq.s32.totalorder %v61, %v115
    %vm119 = vcmp.eq.s32.totalorder %v62, %v115
    %vm120 = vcmp.eq.s32.totalorder %v63, %v115
    %vm121 = vcmp.eq.s32.totalorder %v64, %v115
    %vm122 = vcmp.eq.s32.totalorder %v65, %v115
    %vm123 = vcmp.eq.s32.totalorder %v66, %v115
    %vm124 = vcmp.eq.s32.totalorder %v67, %v115
    %vm125 = vcmp.eq.s32.totalorder %v68, %v115
    %vm126 = vcmp.eq.s32.totalorder %v69, %v115
    %vm127 = vcmp.eq.s32.totalorder %v70, %v115
    %vm128 = vcmp.eq.s32.totalorder %v71, %v115
    %vm129 = vcmp.eq.s32.totalorder %v72, %v115
    %vm130 = vcmp.eq.s32.totalorder %v73, %v115
    %vm131 = vcmp.eq.s32.totalorder %v74, %v115
    %v132 = vsel %vm116, 1.0, 0.0
    %v133 = vsel %vm117, 1.0, 0.0
    %v134 = vsel %vm118, 1.0, 0.0
    %v135 = vsel %vm119, 1.0, 0.0
    %v136 = vsel %vm120, 1.0, 0.0
    %v137 = vsel %vm121, 1.0, 0.0
    %v138 = vsel %vm122, 1.0, 0.0
    %v139 = vsel %vm123, 1.0, 0.0
    %v140 = vsel %vm124, 1.0, 0.0
    %v141 = vsel %vm125, 1.0, 0.0
    %v142 = vsel %vm126, 1.0, 0.0
    %v143 = vsel %vm127, 1.0, 0.0
    %v144 = vsel %vm128, 1.0, 0.0
    %v145 = vsel %vm129, 1.0, 0.0
    %v146 = vsel %vm130, 1.0, 0.0
    %v147 = vsel %vm131, 1.0, 0.0
    %v148 = vadd.f32 %v96, %v132
    %v149 = vadd.f32 %v97, %v133
    %v150 = vadd.f32 %v98, %v134
    %v151 = vadd.f32 %v99, %v135
    %v152 = vadd.f32 %v100, %v136
    %v153 = vadd.f32 %v101, %v137
    %v154 = vadd.f32 %v102, %v138
    %v155 = vadd.f32 %v103, %v139
    %v156 = vadd.f32 %v104, %v140
    %v157 = vadd.f32 %v105, %v141
    %v158 = vadd.f32 %v106, %v142
    %v159 = vadd.f32 %v107, %v143
    %v160 = vadd.f32 %v108, %v144
    %v161 = vadd.f32 %v109, %v145
    %v162 = vadd.f32 %v110, %v146
    %v163 = vadd.f32 %v111, %v147
    %v164 = vlaneseq
    %v165 = vshrl.u32 %v164, 7
    %v166 = vsub.s32 2, %v165
    %v167 = vrot.slane %v75, %v166
    %vm168 = vcmp.eq.s32.totalorder %v59, %v167
    %vm169 = vcmp.eq.s32.totalorder %v60, %v167
    %vm170 = vcmp.eq.s32.totalorder %v61, %v167
    %vm171 = vcmp.eq.s32.totalorder %v62, %v167
    %vm172 = vcmp.eq.s32.totalorder %v63, %v167
    %vm173 = vcmp.eq.s32.totalorder %v64, %v167
    %vm174 = vcmp.eq.s32.totalorder %v65, %v167
    %vm175 = vcmp.eq.s32.totalorder %v66, %v167
    %vm176 = vcmp.eq.s32.totalorder %v67, %v167
    %vm177 = vcmp.eq.s32.totalorder %v68, %v167
    %vm178 = vcmp.eq.s32.totalorder %v69, %v167
    %vm179 = vcmp.eq.s32.totalorder %v70, %v167
    %vm180 = vcmp.eq.s32.totalorder %v71, %v167
    %vm181 = vcmp.eq.s32.totalorder %v72, %v167
    %vm182 = vcmp.eq.s32.totalorder %v73, %v167
    %vm183 = vcmp.eq.s32.totalorder %v74, %v167
    %v184 = vsel %vm168, 1.0, 0.0
    %v185 = vsel %vm169, 1.0, 0.0
    %v186 = vsel %vm170, 1.0, 0.0
    %v187 = vsel %vm171, 1.0, 0.0
    %v188 = vsel %vm172, 1.0, 0.0
    %v189 = vsel %vm173, 1.0, 0.0
    %v190 = vsel %vm174, 1.0, 0.0
    %v191 = vsel %vm175, 1.0, 0.0
    %v192 = vsel %vm176, 1.0, 0.0
    %v193 = vsel %vm177, 1.0, 0.0
    %v194 = vsel %vm178, 1.0, 0.0
    %v195 = vsel %vm179, 1.0, 0.0
    %v196 = vsel %vm180, 1.0, 0.0
    %v197 = vsel %vm181, 1.0, 0.0
    %v198 = vsel %vm182, 1.0, 0.0
    %v199 = vsel %vm183, 1.0, 0.0
    %v200 = vlaneseq
    %v201 = vshrl.u32 %v200, 7
    %v202 = vsub.s32 3, %v201
    %v203 = vrot.slane %v75, %v202
    %vm204 = vcmp.eq.s32.totalorder %v59, %v203
    %vm205 = vcmp.eq.s32.totalorder %v60, %v203
    %vm206 = vcmp.eq.s32.totalorder %v61, %v203
    %vm207 = vcmp.eq.s32.totalorder %v62, %v203
    %vm208 = vcmp.eq.s32.totalorder %v63, %v203
    %vm209 = vcmp.eq.s32.totalorder %v64, %v203
    %vm210 = vcmp.eq.s32.totalorder %v65, %v203
    %vm211 = vcmp.eq.s32.totalorder %v66, %v203
    %vm212 = vcmp.eq.s32.totalorder %v67, %v203
    %vm213 = vcmp.eq.s32.totalorder %v68, %v203
    %vm214 = vcmp.eq.s32.totalorder %v69, %v203
    %vm215 = vcmp.eq.s32.totalorder %v70, %v203
    %vm216 = vcmp.eq.s32.totalorder %v71, %v203
    %vm217 = vcmp.eq.s32.totalorder %v72, %v203
    %vm218 = vcmp.eq.s32.totalorder %v73, %v203
    %vm219 = vcmp.eq.s32.totalorder %v74, %v203
    %v220 = vsel %vm204, 1.0, 0.0
    %v221 = vsel %vm205, 1.0, 0.0
    %v222 = vsel %vm206, 1.0, 0.0
    %v223 = vsel %vm207, 1.0, 0.0
    %v224 = vsel %vm208, 1.0, 0.0
    %v225 = vsel %vm209, 1.0, 0.0
    %v226 = vsel %vm210, 1.0, 0.0
    %v227 = vsel %vm211, 1.0, 0.0
    %v228 = vsel %vm212, 1.0, 0.0
    %v229 = vsel %vm213, 1.0, 0.0
    %v230 = vsel %vm214, 1.0, 0.0
    %v231 = vsel %vm215, 1.0, 0.0
    %v232 = vsel %vm216, 1.0, 0.0
    %v233 = vsel %vm217, 1.0, 0.0
    %v234 = vsel %vm218, 1.0, 0.0
    %v235 = vsel %vm219, 1.0, 0.0
    %v236 = vadd.f32 %v184, %v220
    %v237 = vadd.f32 %v185, %v221
    %v238 = vadd.f32 %v186, %v222
    %v239 = vadd.f32 %v187, %v223
    %v240 = vadd.f32 %v188, %v224
    %v241 = vadd.f32 %v189, %v225
    %v242 = vadd.f32 %v190, %v226
    %v243 = vadd.f32 %v191, %v227
    %v244 = vadd.f32 %v192, %v228
    %v245 = vadd.f32 %v193, %v229
    %v246 = vadd.f32 %v194, %v230
    %v247 = vadd.f32 %v195, %v231
    %v248 = vadd.f32 %v196, %v232
    %v249 = vadd.f32 %v197, %v233
    %v250 = vadd.f32 %v198, %v234
    %v251 = vadd.f32 %v199, %v235
    %v252 = vadd.f32 %v148, %v236
    %v253 = vadd.f32 %v149, %v237
    %v254 = vadd.f32 %v150, %v238
    %v255 = vadd.f32 %v151, %v239
    %v256 = vadd.f32 %v152, %v240
    %v257 = vadd.f32 %v153, %v241
    %v258 = vadd.f32 %v154, %v242
    %v259 = vadd.f32 %v155, %v243
    %v260 = vadd.f32 %v156, %v244
    %v261 = vadd.f32 %v157, %v245
    %v262 = vadd.f32 %v158, %v246
    %v263 = vadd.f32 %v159, %v247
    %v264 = vadd.f32 %v160, %v248
    %v265 = vadd.f32 %v161, %v249
    %v266 = vadd.f32 %v162, %v250
    %v267 = vadd.f32 %v163, %v251
    %v268 = vlaneseq
    %v269 = vshrl.u32 %v268, 7
    %v270 = vsub.s32 4, %v269
    %v271 = vrot.slane %v75, %v270
    %vm272 = vcmp.eq.s32.totalorder %v59, %v271
    %vm273 = vcmp.eq.s32.totalorder %v60, %v271
    %vm274 = vcmp.eq.s32.totalorder %v61, %v271
    %vm275 = vcmp.eq.s32.totalorder %v62, %v271
    %vm276 = vcmp.eq.s32.totalorder %v63, %v271
    %vm277 = vcmp.eq.s32.totalorder %v64, %v271
    %vm278 = vcmp.eq.s32.totalorder %v65, %v271
    %vm279 = vcmp.eq.s32.totalorder %v66, %v271
    %vm280 = vcmp.eq.s32.totalorder %v67, %v271
    %vm281 = vcmp.eq.s32.totalorder %v68, %v271
    %vm282 = vcmp.eq.s32.totalorder %v69, %v271
    %vm283 = vcmp.eq.s32.totalorder %v70, %v271
    %vm284 = vcmp.eq.s32.totalorder %v71, %v271
    %vm285 = vcmp.eq.s32.totalorder %v72, %v271
    %vm286 = vcmp.eq.s32.totalorder %v73, %v271
    %vm287 = vcmp.eq.s32.totalorder %v74, %v271
    %v288 = vsel %vm272, 1.0, 0.0
    %v289 = vsel %vm273, 1.0, 0.0
    %v290 = vsel %vm274, 1.0, 0.0
    %v291 = vsel %vm275, 1.0, 0.0
    %v292 = vsel %vm276, 1.0, 0.0
    %v293 = vsel %vm277, 1.0, 0.0
    %v294 = vsel %vm278, 1.0, 0.0
    %v295 = vsel %vm279, 1.0, 0.0
    %v296 = vsel %vm280, 1.0, 0.0
    %v297 = vsel %vm281, 1.0, 0.0
    %v298 = vsel %vm282, 1.0, 0.0
    %v299 = vsel %vm283, 1.0, 0.0
    %v300 = vsel %vm284, 1.0, 0.0
    %v301 = vsel %vm285, 1.0, 0.0
    %v302 = vsel %vm286, 1.0, 0.0
    %v303 = vsel %vm287, 1.0, 0.0
    %v304 = vlaneseq
    %v305 = vshrl.u32 %v304, 7
    %v306 = vsub.s32 5, %v305
    %v307 = vrot.slane %v75, %v306
    %vm308 = vcmp.eq.s32.totalorder %v59, %v307
    %vm309 = vcmp.eq.s32.totalorder %v60, %v307
    %vm310 = vcmp.eq.s32.totalorder %v61, %v307
    %vm311 = vcmp.eq.s32.totalorder %v62, %v307
    %vm312 = vcmp.eq.s32.totalorder %v63, %v307
    %vm313 = vcmp.eq.s32.totalorder %v64, %v307
    %vm314 = vcmp.eq.s32.totalorder %v65, %v307
    %vm315 = vcmp.eq.s32.totalorder %v66, %v307
    %vm316 = vcmp.eq.s32.totalorder %v67, %v307
    %vm317 = vcmp.eq.s32.totalorder %v68, %v307
    %vm318 = vcmp.eq.s32.totalorder %v69, %v307
    %vm319 = vcmp.eq.s32.totalorder %v70, %v307
    %vm320 = vcmp.eq.s32.totalorder %v71, %v307
    %vm321 = vcmp.eq.s32.totalorder %v72, %v307
    %vm322 = vcmp.eq.s32.totalorder %v73, %v307
    %vm323 = vcmp.eq.s32.totalorder %v74, %v307
    %v324 = vsel %vm308, 1.0, 0.0
    %v325 = vsel %vm309, 1.0, 0.0
    %v326 = vsel %vm310, 1.0, 0.0
    %v327 = vsel %vm311, 1.0, 0.0
    %v328 = vsel %vm312, 1.0, 0.0
    %v329 = vsel %vm313, 1.0, 0.0
    %v330 = vsel %vm314, 1.0, 0.0
    %v331 = vsel %vm315, 1.0, 0.0
    %v332 = vsel %vm316, 1.0, 0.0
    %v333 = vsel %vm317, 1.0, 0.0
    %v334 = vsel %vm318, 1.0, 0.0
    %v335 = vsel %vm319, 1.0, 0.0
    %v336 = vsel %vm320, 1.0, 0.0
    %v337 = vsel %vm321, 1.0, 0.0
    %v338 = vsel %vm322, 1.0, 0.0
    %v339 = vsel %vm323, 1.0, 0.0
    %v340 = vadd.f32 %v288, %v324
    %v341 = vadd.f32 %v289, %v325
    %v342 = vadd.f32 %v290, %v326
    %v343 = vadd.f32 %v291, %v327
    %v344 = vadd.f32 %v292, %v328
    %v345 = vadd.f32 %v293, %v329
    %v346 = vadd.f32 %v294, %v330
    %v347 = vadd.f32 %v295, %v331
    %v348 = vadd.f32 %v296, %v332
    %v349 = vadd.f32 %v297, %v333
    %v350 = vadd.f32 %v298, %v334
    %v351 = vadd.f32 %v299, %v335
    %v352 = vadd.f32 %v300, %v336
    %v353 = vadd.f32 %v301, %v337
    %v354 = vadd.f32 %v302, %v338
    %v355 = vadd.f32 %v303, %v339
    %v356 = vstv %s39
    %v357 = vmul.f32 %v356, %v340
    %v358 = vmul.f32 %v356, %v341
    %v359 = vmul.f32 %v356, %v342
    %v360 = vmul.f32 %v356, %v343
    %v361 = vmul.f32 %v356, %v344
    %v362 = vmul.f32 %v356, %v345
    %v363 = vmul.f32 %v356, %v346
    %v364 = vmul.f32 %v356, %v347
    %v365 = vmul.f32 %v356, %v348
    %v366 = vmul.f32 %v356, %v349
    %v367 = vmul.f32 %v356, %v350
    %v368 = vmul.f32 %v356, %v351
    %v369 = vmul.f32 %v356, %v352
    %v370 = vmul.f32 %v356, %v353
    %v371 = vmul.f32 %v356, %v354
    %v372 = vmul.f32 %v356, %v355
    %v373 = vadd.f32 %v252, %v357
    %v374 = vadd.f32 %v253, %v358
    %v375 = vadd.f32 %v254, %v359
    %v376 = vadd.f32 %v255, %v360
    %v377 = vadd.f32 %v256, %v361
    %v378 = vadd.f32 %v257, %v362
    %v379 = vadd.f32 %v258, %v363
    %v380 = vadd.f32 %v259, %v364
    %v381 = vadd.f32 %v260, %v365
    %v382 = vadd.f32 %v261, %v366
    %v383 = vadd.f32 %v262, %v367
    %v384 = vadd.f32 %v263, %v368
    %v385 = vadd.f32 %v264, %v369
    %v386 = vadd.f32 %v265, %v370
    %v387 = vadd.f32 %v266, %v371
    %v388 = vadd.f32 %v267, %v372
    %v389 = vld [vmem:[#allocation2] sm:$0x3]
    %v390 = vld [vmem:[%s0] sm:$0x3]
    %391 = vmatprep.subr.mxu0 0.0
    %392 = vmatpush1.msra.mxu0 %v373
    %393 = vmatprep.subr.mxu0 0.0
    %394 = vmatpush1.msra.mxu0 %v374
    %395 = vmatprep.subr.mxu0 0.0
    %396 = vmatpush1.msra.mxu0 %v375
    %397 = vmatprep.subr.mxu0 0.0
    %398 = vmatpush1.msra.mxu0 %v376
    %399 = vmatprep.subr.mxu0 0.0
    %400 = vmatpush1.msra.mxu0 %v377
    %401 = vmatprep.subr.mxu0 0.0
    %402 = vmatpush1.msra.mxu0 %v378
    %403 = vmatprep.subr.mxu0 0.0
    %404 = vmatpush1.msra.mxu0 %v379
    %405 = vmatprep.subr.mxu0 0.0
    %406 = vmatpush1.msra.mxu0 %v380
    %407 = vmatprep.subr.mxu0 0.0
    %408 = vmatpush1.msra.mxu0 %v381
    %409 = vmatprep.subr.mxu0 0.0
    %410 = vmatpush1.msra.mxu0 %v382
    %411 = vmatprep.subr.mxu0 0.0
    %412 = vmatpush1.msra.mxu0 %v383
    %413 = vmatprep.subr.mxu0 0.0
    %414 = vmatpush1.msra.mxu0 %v384
    %415 = vmatprep.subr.mxu0 0.0
    %416 = vmatpush1.msra.mxu0 %v385
    %417 = vmatprep.subr.mxu0 0.0
    %418 = vmatpush1.msra.mxu0 %v386
    %419 = vmatprep.subr.mxu0 0.0
    %420 = vmatpush1.msra.mxu0 %v387
    %421 = vmatprep.subr.mxu0 0.0
    %422 = vmatpush1.msra.mxu0 %v388
    %423 = vmatprep.subr.mxu0 0.0
    %424 = vmatpush1.msra.mxu0 0.0
    %425 = vmatprep.subr.mxu0 0.0
    %426 = vmatpush1.msra.mxu0 0.0
    %427 = vmatprep.subr.mxu0 0.0
    %428 = vmatpush1.msra.mxu0 0.0
    %429 = vmatprep.subr.mxu0 0.0
    %430 = vmatpush1.msra.mxu0 0.0
    %431 = vmatprep.subr.mxu0 0.0
    %432 = vmatpush1.msra.mxu0 0.0
    %433 = vmatprep.subr.mxu0 0.0
    %434 = vmatpush1.msra.mxu0 0.0
    %435 = vmatprep.subr.mxu0 0.0
    %436 = vmatpush1.msra.mxu0 0.0
    %437 = vmatprep.subr.mxu0 0.0
    %438 = vmatpush1.msra.mxu0 0.0
    %439 = vmatprep.subr.mxu0 0.0
    %440 = vmatpush1.msra.mxu0 0.0
    %441 = vmatprep.subr.mxu0 0.0
    %442 = vmatpush1.msra.mxu0 0.0
    %443 = vmatprep.subr.mxu0 0.0
    %444 = vmatpush1.msra.mxu0 0.0
    %445 = vmatprep.subr.mxu0 0.0
    %446 = vmatpush1.msra.mxu0 0.0
    %447 = vmatprep.subr.mxu0 0.0
    %448 = vmatpush1.msra.mxu0 0.0
    %449 = vmatprep.subr.mxu0 0.0
    %450 = vmatpush1.msra.mxu0 0.0
    %451 = vmatprep.subr.mxu0 0.0
    %452 = vmatpush1.msra.mxu0 0.0
    %453 = vmatprep.subr.mxu0 0.0
    %454 = vmatpush1.msra.mxu0 0.0
    %455 = vmatprep.mubr.f32.mxu0 0.0
    %456 = vmatmul.mubr.f32.gmra.mrb[0].mxu0 %v390
    %v457 = vpop.f32.mrb[0].mxu0
    %v458 = vadd.f32 0.0, %v457
    %v459 = vpop.f32.mrb[0].mxu0
    %460 = vdwg.mxu0
    %v461 = vadd.f32 %v389, %v458
    %462 = vst [vmem:[#allocation2] sm:$0x3] %v461
    // Predicated region
    $region30: #{forward.1} parent=1 // pred_check
      %p463 = pneg %p34
    $region31: #{forward.1} parent=1 // pred_check_branch
      %465 = sbr.rel (%p463) target = $region33
    $region32: #{forward.1} parent=1 // pred_region
      %s466 = sld [smem:[#allocation3]]
      %v467 = vld [vmem:[#allocation2] sm:$0x3]
      %v468 = vstv %s466
      %v469 = vmul.f32 %v468, %v467
      %v470 = vld [vmem:[%s1] sm:$0x3]
      %v471 = vld [vmem:[%s3] sm:$0xf]
      %s472 = sld [smem:[#allocation3 + $0x2]]
      %v473 = vmul.f32 %v470, %v470
      %v475 = vrot.slane %v473, 1
      %v477 = vadd.f32 %v473, %v475
      %v479 = vrot.slane %v470, 1
      %v481 = vmul.f32 %v469, %v479
      %v482 = vrot.slane %v470, 7
      %v484 = vmul.f32 %v469, %v482
      %v486 = vrot.slane %v484, 1
      %v488 = vsub.f32 %v481, %v486
      %v489 = vstv %s472
      %v490 = vmul.f32 %v489, %v488
      %v492 = vrot.slane %v471, 3
      %v494 = vadd.f32 %v490, %v492
      %v496 = vrot.slane %v477, 6
      %v498 = vmul.f32 %v471, %v496
      %v500 = vrot.slane %v498, 2
      %v502 = vadd.f32 %v494, %v500
      %v503 = vmul.f32 %v502, %v479
      %v505 = vrot.slane %v469, 1
      %v507 = vsub.f32 %v503, %v505
      %v508 = vrot.slane %v471, 1
      %v510 = vadd.f32 %v507, %v508
      %v511 = vsub.f32 %v469, %v471
      %v512 = vmul.f32 %v502, %v470
      %v513 = vsub.f32 %v511, %v512
      %v515 = vrot.slane %v513, 7
      %vm517 = vcmask 1040384
      %v518 = vsel %vm517, %v510, %v515
      %519 = vst [vmem:[#allocation6] sm:$0x3] %v518
    $region33: #{forward.1} parent=1 // pred_fallthru
      _
    // Predicated region
    $region34: #{forward.1} parent=1 // pred_check
      _
    $region35: #{forward.1} parent=1 // pred_check_branch
      %521 = sbr.rel (0) target = $region37
    $region36: #{forward.1} parent=1 // pred_region
      %s523 = ssub.s32 32, 32
      %524 = vsyncadd [#allocation4], %s523
      %s526 = sshll.u32 [#allocation6], 4
      %s527 = int_to_ptr.vmem [resolvable:$true] %s526
      %529 = dma.vmem_to_hbm [thread:$0]  %s527, 32, %s5, [#allocation4]
    $region37: #{forward.1} parent=1 // pred_fallthru
      _
    // Predicated region
    $region38: #{forward.1} parent=1 // pred_check
      _
    $region39: #{forward.1} parent=1 // pred_check_branch
      %531 = sbr.rel (0) target = $region41
    $region40: #{forward.1} parent=1 // pred_region
      %532 = dma.done [#allocation4], 32
    $region41: #{forward.1} parent=1 // pred_fallthru
      _
    %533 = vsyncpa [#allocation4], 1
    %534 = vsyncpa [#allocation5], 1

</llo_original>
